<compile_context>
chip_gen: v6e
topology: v6e:2x2x1
jax: 0.10.0
libtpu: 0.0.40
codegen_flags: <defaults>
</compile_context>

<pallas_src>
import jax
import jax.numpy as jnp
from jax.experimental import pallas as pl
from jax.experimental.pallas import tpu as pltpu

EPS = 1e-5
LOGITS = 3
PAD_OUT = 128  # lane-dense padded output width


# ---------------------------------------------------------------------------
# Kernel
# ---------------------------------------------------------------------------
def _mish_fast(h):
    # mish(x) = x * tanh(softplus(x)) = x * (e^2 + 2e) / (e^2 + 2e + 2),  e = exp(x).
    # Clamp the exp argument; for x > 20, mish(x) == x to f32 precision.
    e = jnp.exp(jnp.minimum(h, 20.0))
    n = e * (e + 2.0)
    return jnp.where(h > 20.0, h, h * (n / (n + 2.0)))


def classifier_kernel(x_ref, w1_ref, b1_ref, w2_ref, b2_ref, w3_ref, b3_ref, out_ref):
    h = x_ref[...]
    h = _mish_fast(jnp.dot(h, w1_ref[...], preferred_element_type=jnp.float32) + b1_ref[...])
    h = _mish_fast(jnp.dot(h, w2_ref[...], preferred_element_type=jnp.float32) + b2_ref[...])
    out_ref[...] = jnp.dot(h, w3_ref[...], preferred_element_type=jnp.float32) + b3_ref[...]


# ---------------------------------------------------------------------------
# Wrapper: BN folding + batch-tiled pallas_call
# ---------------------------------------------------------------------------
def _round_up(n, m):
    return ((n + m - 1) // m) * m


def _fold_bn_into_linear(g, b, m, v, w, c):
    """Fold  z = BN(x) @ w + c  into  z = x @ w' + c'   (inference-mode BN is affine)."""
    scale = g * jax.lax.rsqrt(v + EPS)        # (1, fin)
    shift = b - m * scale                     # (1, fin)
    w_f = scale.reshape(-1, 1) * w            # (fin, fout)
    c_f = shift @ w + c                       # (1, fout)
    return w_f, c_f


def fold_params(params):
    (g0, b0, m0, v0,
     w1, c1, g1, b1, m1, v1,
     w2, c2, g2, b2, m2, v2,
     w3, c3) = params
    w1f, c1f = _fold_bn_into_linear(g0, b0, m0, v0, w1, c1)   # BN(input) -> Linear1
    w2f, c2f = _fold_bn_into_linear(g1, b1, m1, v1, w2, c2)   # BN1       -> Linear2
    w3f, c3f = _fold_bn_into_linear(g2, b2, m2, v2, w3, c3)   # BN2       -> classifier
    # Pad the 3-wide classifier head to a lane-dense 128-wide slab (zero cost on MXU).
    w3p = jnp.zeros((w3f.shape[0], PAD_OUT), jnp.float32).at[:, :LOGITS].set(w3f)
    c3p = jnp.zeros((1, PAD_OUT), jnp.float32).at[:, :LOGITS].set(c3f)
    return w1f, c1f, w2f, c2f, w3p, c3p


def classifier_forward(x, params, block_m=512):
    n, f_in = x.shape
    w1f, c1f, w2f, c2f, w3p, c3p = fold_params(params)
    h1 = w1f.shape[1]
    h2 = w2f.shape[1]

    tm = min(block_m, _round_up(n, 8))
    grid = (pl.cdiv(n, tm),)

    def fixed(shape):
        # Weights/biases: constant block index -> stay resident in VMEM across the grid.
        return pl.BlockSpec(shape, lambda i: (0, 0))

    out_padded = pl.pallas_call(
        classifier_kernel,
        out_shape=jax.ShapeDtypeStruct((n, PAD_OUT), jnp.float32),
        grid=grid,
        in_specs=[
            pl.BlockSpec((tm, f_in), lambda i: (i, 0)),   # x: streamed per batch tile
            fixed((f_in, h1)), fixed((1, h1)),            # W1', b1'
            fixed((h1, h2)), fixed((1, h2)),              # W2', b2'
            fixed((h2, PAD_OUT)), fixed((1, PAD_OUT)),    # W3' (padded), b3' (padded)
        ],
        out_specs=pl.BlockSpec((tm, PAD_OUT), lambda i: (i, 0)),
        compiler_params=pltpu.CompilerParams(
            dimension_semantics=("parallel",)),           # shard batch tiles over TCs
    )(x, w1f, c1f, w2f, c2f, w3p, c3p)
    return out_padded[:, :LOGITS]


# ---------------------------------------------------------------------------
# Deterministic synthetic parameters matching Classifier(inputSize, layers=3)
# ---------------------------------------------------------------------------
def make_params(key, input_size=32, layers=3):
    dims_in = [input_size, input_size * 2 ** (layers - 2)]   # 32 -> 64 -> 32
    dims = [input_size] + dims_in                              # layer widths: 32, 64, 32
    keys = jax.random.split(key, 16)
    ki = iter(range(16))

    def vec(k, f, lo=-0.5, hi=0.5):
        return jax.random.uniform(k, (1, f), jnp.float32, lo, hi)

    # BN0 over inputSize
    g0 = vec(keys[next(ki)], input_size, 0.5, 1.5)
    b0 = vec(keys[next(ki)], input_size)
    m0 = vec(keys[next(ki)], input_size)
    v0 = vec(keys[next(ki)], input_size, 0.5, 1.5)

    def linear(k, fin, fout):
        kw, kb = jax.random.split(k)
        scale = 1.0 / jnp.sqrt(fin)
        w = jax.random.uniform(kw, (fin, fout), jnp.float32, -scale, scale)  # (in, out)
        b = jax.random.uniform(kb, (1, fout), jnp.float32, -scale, scale)
        return w, b

    # block 1: Linear(32, 64) + Mish + BN(64)
    w1, c1 = linear(keys[next(ki)], dims[0], dims[1])
    g1 = vec(keys[next(ki)], dims[1], 0.5, 1.5)
    b1 = vec(keys[next(ki)], dims[1])
    m1 = vec(keys[next(ki)], dims[1])
    v1 = vec(keys[next(ki)], dims[1], 0.5, 1.5)

    # block 2: Linear(64, 32) + Mish + BN(32)
    w2, c2 = linear(keys[next(ki)], dims[1], dims[2])
    g2 = vec(keys[next(ki)], dims[2], 0.5, 1.5)
    b2 = vec(keys[next(ki)], dims[2])
    m2 = vec(keys[next(ki)], dims[2])
    v2 = vec(keys[next(ki)], dims[2], 0.5, 1.5)

    # classifier: Linear(32, 3)
    w3, c3 = linear(keys[next(ki)], dims[2], 3)

    return (g0, b0, m0, v0,
            w1, c1, g1, b1, m1, v1,
            w2, c2, g2, b2, m2, v2,
            w3, c3)


# ---------------------------------------------------------------------------
# Pure-JAX reference: original (unfolded) semantics with the original Mish form
# ---------------------------------------------------------------------------
def _mish_ref(h):
    sp = jnp.maximum(h, 0.0) + jnp.log1p(jnp.exp(-jnp.abs(h)))
    return h * jnp.tanh(sp)


def _bn_ref(h, g, b, m, v):
    return (h - m) * jax.lax.rsqrt(v + EPS) * g + b


def reference_forward(x, p):
    (g0, b0, m0, v0,
     w1, c1, g1, b1, m1, v1,
     w2, c2, g2, b2, m2, v2,
     w3, c3) = p
    h = _bn_ref(x, g0, b0, m0, v0)
    h = _bn_ref(_mish_ref(h @ w1 + c1), g1, b1, m1, v1)
    h = _bn_ref(_mish_ref(h @ w2 + c2), g2, b2, m2, v2)
    return h @ w3 + c3


if __name__ == "__main__":
    key = jax.random.PRNGKey(0)
    kx, kp = jax.random.split(key)

    # N chosen to exercise multiple batch tiles plus a padded final tile.
    N, INPUT_SIZE, LAYERS = 500, 32, 3
    x = jax.random.normal(kx, (N, INPUT_SIZE), jnp.float32)
    params = make_params(kp, INPUT_SIZE, LAYERS)

    out = classifier_forward(x, params, block_m=128)   # grid=(4,), last tile OOB-masked
    out = jax.block_until_ready(out)

    ref = reference_forward(x, params)
    assert out.shape == (N, LOGITS)
    assert jnp.allclose(out, ref, atol=5e-4, rtol=5e-4), "mismatch vs pure-JAX reference"

    print("KERNEL_OK")
</pallas_src>

<mosaic_0001>
module attributes {stable_mosaic.version = 11 : i64} {
  func.func @classifier_kernel(%arg0: i32, %arg1: memref<128x32xf32, #tpu.memory_space<vmem>>, %arg2: memref<32x32xf32, #tpu.memory_space<vmem>>, %arg3: memref<1x32xf32, #tpu.memory_space<vmem>>, %arg4: memref<32x64xf32, #tpu.memory_space<vmem>>, %arg5: memref<1x64xf32, #tpu.memory_space<vmem>>, %arg6: memref<64x128xf32, #tpu.memory_space<vmem>>, %arg7: memref<1x128xf32, #tpu.memory_space<vmem>>, %arg8: memref<128x128xf32, #tpu.memory_space<vmem>>) attributes {dimension_semantics = [#tpu.dimension_semantics<parallel>], iteration_bounds = array<i64: 4>, scalar_prefetch = 0 : i64, scratch_operands = 0 : i64, tpu.core_type = #tpu.core_type<tc>, window_params = [{transform_indices = @transform_0, window_bounds = array<i64: 128, 32>}, {pipeline_mode = #tpu.pipeline_mode<synchronous>, transform_indices = @transform_1, window_bounds = array<i64: 32, 32>}, {pipeline_mode = #tpu.pipeline_mode<synchronous>, transform_indices = @transform_2, window_bounds = array<i64: 1, 32>}, {pipeline_mode = #tpu.pipeline_mode<synchronous>, transform_indices = @transform_3, window_bounds = array<i64: 32, 64>}, {pipeline_mode = #tpu.pipeline_mode<synchronous>, transform_indices = @transform_4, window_bounds = array<i64: 1, 64>}, {pipeline_mode = #tpu.pipeline_mode<synchronous>, transform_indices = @transform_5, window_bounds = array<i64: 64, 128>}, {pipeline_mode = #tpu.pipeline_mode<synchronous>, transform_indices = @transform_6, window_bounds = array<i64: 1, 128>}, {transform_indices = @transform_7, window_bounds = array<i64: 128, 128>}]} {
    %c0 = arith.constant 0 : index
    %c0_0 = arith.constant 0 : index
    %0 = vector.load %arg1[%c0, %c0_0] : memref<128x32xf32, #tpu.memory_space<vmem>>, vector<128x32xf32>
    %c0_1 = arith.constant 0 : index
    %c0_2 = arith.constant 0 : index
    %1 = vector.load %arg2[%c0_1, %c0_2] : memref<32x32xf32, #tpu.memory_space<vmem>>, vector<32x32xf32>
    %cst = arith.constant dense<0.000000e+00> : vector<128x32xf32>
    %2 = tpu.matmul %0, %1, %cst {dimension_numbers = #tpu.dot_dimension_numbers<[1], [0], [0], [1], [0, 0, 1, 1], [], []>} : vector<128x32xf32>, vector<32x32xf32>, vector<128x32xf32> -> vector<128x32xf32>
    %c0_3 = arith.constant 0 : index
    %c0_4 = arith.constant 0 : index
    %3 = vector.load %arg3[%c0_3, %c0_4] : memref<1x32xf32, #tpu.memory_space<vmem>>, vector<1x32xf32>
    %4 = vector.broadcast %3 : vector<1x32xf32> to vector<128x32xf32>
    %5 = arith.addf %2, %4 : vector<128x32xf32>
    %cst_5 = arith.constant 2.000000e+01 : f32
    %6 = vector.broadcast %cst_5 : f32 to vector<128x32xf32>
    %7 = arith.minimumf %5, %6 : vector<128x32xf32>
    %8 = math.exp %7 : vector<128x32xf32>
    %cst_6 = arith.constant 2.000000e+00 : f32
    %9 = vector.broadcast %cst_6 : f32 to vector<128x32xf32>
    %10 = arith.addf %8, %9 : vector<128x32xf32>
    %11 = arith.mulf %8, %10 : vector<128x32xf32>
    %cst_7 = arith.constant 2.000000e+01 : f32
    %12 = vector.broadcast %cst_7 : f32 to vector<128x32xf32>
    %13 = arith.cmpf ogt, %5, %12 : vector<128x32xf32>
    %cst_8 = arith.constant 2.000000e+00 : f32
    %14 = vector.broadcast %cst_8 : f32 to vector<128x32xf32>
    %15 = arith.addf %11, %14 : vector<128x32xf32>
    %16 = arith.divf %11, %15 : vector<128x32xf32>
    %17 = arith.mulf %5, %16 : vector<128x32xf32>
    %18 = arith.select %13, %5, %17 : vector<128x32xi1>, vector<128x32xf32>
    %c0_9 = arith.constant 0 : index
    %c0_10 = arith.constant 0 : index
    %19 = vector.load %arg4[%c0_9, %c0_10] : memref<32x64xf32, #tpu.memory_space<vmem>>, vector<32x64xf32>
    %cst_11 = arith.constant dense<0.000000e+00> : vector<128x64xf32>
    %20 = tpu.matmul %18, %19, %cst_11 {dimension_numbers = #tpu.dot_dimension_numbers<[1], [0], [0], [1], [0, 0, 1, 1], [], []>} : vector<128x32xf32>, vector<32x64xf32>, vector<128x64xf32> -> vector<128x64xf32>
    %c0_12 = arith.constant 0 : index
    %c0_13 = arith.constant 0 : index
    %21 = vector.load %arg5[%c0_12, %c0_13] : memref<1x64xf32, #tpu.memory_space<vmem>>, vector<1x64xf32>
    %22 = vector.broadcast %21 : vector<1x64xf32> to vector<128x64xf32>
    %23 = arith.addf %20, %22 : vector<128x64xf32>
    %cst_14 = arith.constant 2.000000e+01 : f32
    %24 = vector.broadcast %cst_14 : f32 to vector<128x64xf32>
    %25 = arith.minimumf %23, %24 : vector<128x64xf32>
    %26 = math.exp %25 : vector<128x64xf32>
    %cst_15 = arith.constant 2.000000e+00 : f32
    %27 = vector.broadcast %cst_15 : f32 to vector<128x64xf32>
    %28 = arith.addf %26, %27 : vector<128x64xf32>
    %29 = arith.mulf %26, %28 : vector<128x64xf32>
    %cst_16 = arith.constant 2.000000e+01 : f32
    %30 = vector.broadcast %cst_16 : f32 to vector<128x64xf32>
    %31 = arith.cmpf ogt, %23, %30 : vector<128x64xf32>
    %cst_17 = arith.constant 2.000000e+00 : f32
    %32 = vector.broadcast %cst_17 : f32 to vector<128x64xf32>
    %33 = arith.addf %29, %32 : vector<128x64xf32>
    %34 = arith.divf %29, %33 : vector<128x64xf32>
    %35 = arith.mulf %23, %34 : vector<128x64xf32>
    %36 = arith.select %31, %23, %35 : vector<128x64xi1>, vector<128x64xf32>
    %c0_18 = arith.constant 0 : index
    %c0_19 = arith.constant 0 : index
    %37 = vector.load %arg6[%c0_18, %c0_19] : memref<64x128xf32, #tpu.memory_space<vmem>>, vector<64x128xf32>
    %cst_20 = arith.constant dense<0.000000e+00> : vector<128x128xf32>
    %38 = tpu.matmul %36, %37, %cst_20 {dimension_numbers = #tpu.dot_dimension_numbers<[1], [0], [0], [1], [0, 0, 1, 1], [], []>} : vector<128x64xf32>, vector<64x128xf32>, vector<128x128xf32> -> vector<128x128xf32>
    %c0_21 = arith.constant 0 : index
    %c0_22 = arith.constant 0 : index
    %39 = vector.load %arg7[%c0_21, %c0_22] : memref<1x128xf32, #tpu.memory_space<vmem>>, vector<1x128xf32>
    %40 = vector.broadcast %39 : vector<1x128xf32> to vector<128x128xf32>
    %41 = arith.addf %38, %40 : vector<128x128xf32>
    %c0_23 = arith.constant 0 : index
    %c0_24 = arith.constant 0 : index
    %42 = vector.load %arg8[%c0_23, %c0_24] : memref<128x128xf32, #tpu.memory_space<vmem>>, vector<128x128xf32>
    tpu.vector_store %arg8[%c0_23, %c0_24], %41 {strides = array<i32>} : memref<128x128xf32, #tpu.memory_space<vmem>>, vector<128x128xf32>,
    return
  }
  func.func @transform_0(%arg0: i32) -> (i32, i32) {
    %c0_i32 = arith.constant 0 : i32
    %c0_i32_0 = arith.constant 0 : i32
    return %arg0, %c0_i32 : i32, i32
  }
  func.func @transform_1(%arg0: i32) -> (i32, i32) {
    %c0_i32 = arith.constant 0 : i32
    %c0_i32_0 = arith.constant 0 : i32
    %c0_i32_1 = arith.constant 0 : i32
    return %c0_i32, %c0_i32_0 : i32, i32
  }
  func.func @transform_2(%arg0: i32) -> (i32, i32) {
    %c0_i32 = arith.constant 0 : i32
    %c0_i32_0 = arith.constant 0 : i32
    %c0_i32_1 = arith.constant 0 : i32
    return %c0_i32, %c0_i32_0 : i32, i32
  }
  func.func @transform_3(%arg0: i32) -> (i32, i32) {
    %c0_i32 = arith.constant 0 : i32
    %c0_i32_0 = arith.constant 0 : i32
    %c0_i32_1 = arith.constant 0 : i32
    return %c0_i32, %c0_i32_0 : i32, i32
  }
  func.func @transform_4(%arg0: i32) -> (i32, i32) {
    %c0_i32 = arith.constant 0 : i32
    %c0_i32_0 = arith.constant 0 : i32
    %c0_i32_1 = arith.constant 0 : i32
    return %c0_i32, %c0_i32_0 : i32, i32
  }
  func.func @transform_5(%arg0: i32) -> (i32, i32) {
    %c0_i32 = arith.constant 0 : i32
    %c0_i32_0 = arith.constant 0 : i32
    %c0_i32_1 = arith.constant 0 : i32
    return %c0_i32, %c0_i32_0 : i32, i32
  }
  func.func @transform_6(%arg0: i32) -> (i32, i32) {
    %c0_i32 = arith.constant 0 : i32
    %c0_i32_0 = arith.constant 0 : i32
    %c0_i32_1 = arith.constant 0 : i32
    return %c0_i32, %c0_i32_0 : i32, i32
  }
  func.func @transform_7(%arg0: i32) -> (i32, i32) {
    %c0_i32 = arith.constant 0 : i32
    %c0_i32_0 = arith.constant 0 : i32
    return %arg0, %c0_i32 : i32, i32
  }
}

</mosaic_0001>

<llo_original>
// kernel: tpu_custom_call.1
$region0: #{tpu_custom_call.1}
  #allocation0 [shape = 'u32[]', space=smem, size = 0x4, offset = 0x4, fixed_abs, tag = 'smem constant byte address 0x4 - core index']
  #allocation1 [shape = 'u32[144,128]{1,0:T(1,128)}', space=vmem, size = 0x12000, scoped, tag = 'internal scratch']
  %s0 = inlined_call_operand.vmem [shape: f32[500,32], index: 0, kind: input, shape index: {}]
  %s1 = inlined_call_operand.vmem [shape: f32[32,32], index: 1, kind: input, shape index: {}]
  %s2 = inlined_call_operand.vmem [shape: f32[1,32], index: 2, kind: input, shape index: {}]
  %s3 = inlined_call_operand.vmem [shape: f32[32,64], index: 3, kind: input, shape index: {}]
  %s4 = inlined_call_operand.vmem [shape: f32[1,64], index: 4, kind: input, shape index: {}]
  %s5 = inlined_call_operand.vmem [shape: f32[64,128], index: 5, kind: input, shape index: {}]
  %s6 = inlined_call_operand.vmem [shape: f32[1,128], index: 6, kind: input, shape index: {}]
  %s7 = inlined_call_operand.hbm [shape: f32[500,128], index: 7, kind: output, shape index: {}]
  %s8 = sld [smem:[#allocation0]]
  $region61: #{tpu_custom_call.1} parent=0
    _
  %s10 = ssub.s32 1, %s8
  %s11 = scalar_select 0, %s10, %s8
  $region1: #{tpu_custom_call.1} parent=0
    #allocation2 [shape = 'u8[131072]{0}', space=vmem, size = 0x20000, scoped, tag = 'output window, operand 0']
    #allocation3 [shape = 's32[2]{0}', space=sflag, size = 0x8, scoped, tag = 'scoped memory for tpu_custom_call.1']
    %12 = vsyncpa [#allocation3], 0
    %s13 = scalar_lea.sflag [#allocation3], 1
    %14 = vsyncpa %s13, 0
    loop: start=0, step=1, limit=6
    $region2: #{tpu_custom_call.1} parent=1 // loop_pre_header
      _
    $region3: #{tpu_custom_call.1} parent=1 // loop_header
      %s16 = sphi 0, %s20
      %p17 = scmp.ge.s32.totalorder %s16, 6
      %s26 = sphi 0, %s28
      %s29 = sphi 0, %s26
      %s30 = sphi 0, %s29
      %s46 = sphi 0, %s30
      %s50 = sphi 0, %s50
      %s52 = sphi 0, %s50
      %s53 = sphi 0, %s52
      %s67 = sphi 0, %s53
      %s71 = sphi 0, %s71
      %s73 = sphi 0, %s71
      %s74 = sphi 0, %s73
      %s88 = sphi 0, %s74
      %s92 = sphi 0, %s92
      %s94 = sphi 0, %s92
      %s95 = sphi 0, %s94
      %s109 = sphi 0, %s95
      %s113 = sphi 0, %s113
      %s115 = sphi 0, %s113
      %s116 = sphi 0, %s115
      %s130 = sphi 0, %s116
      %s134 = sphi 0, %s134
      %s136 = sphi 0, %s134
      %s137 = sphi 0, %s136
      %s151 = sphi 0, %s137
      %s155 = sphi 0, %s155
      %s157 = sphi 0, %s155
      %s158 = sphi 0, %s157
      %s172 = sphi 0, %s158
      %s178 = sphi 0, %s180
      %s181 = sphi 0, %s178
      %s182 = sphi 0, %s181
      %s198 = sphi 0, %s182
    $region4: #{tpu_custom_call.1} parent=1 // loop_header_branch
      %19 = sbr.rel (%p17) target = $region8
    $region5: #{tpu_custom_call.1} parent=1 // loop_body
      %s21 = ssub.s32 %s16, 1
      %s22 = ssub.s32 %s16, 2
      %s23 = sadd.s32 %s16, 1
      %s24 = ssub.s32 %s16, %s23
      %p25 = scmp.eq.s32.totalorder %s24, 0
      %s27 = sadd.s32 %s26, 1
      %s28 = scalar_select %p25, %s26, %s27
      %p31 = pneg %p25
      %p32 = scmp.eq.s32.totalorder %s16, 3
      %p33 = por %p31, %p32
      %p34 = scmp.ne.s32.totalorder %s26, %s29
      %p35 = scmp.eq.s32.totalorder %s16, 0
      %p36 = por %p34, %p35
      %p37 = scmp.ne.s32.totalorder %s26, %s29
      %p38 = scmp.eq.s32.totalorder %s21, 3
      %p39 = por %p37, %p38
      %p40 = scmp.ne.s32.totalorder %s29, %s30
      %p41 = scmp.eq.s32.totalorder %s21, 0
      %p42 = por %p40, %p41
      %p43 = scmp.ne.s32.totalorder %s29, %s30
      %p44 = scmp.eq.s32.totalorder %s22, 3
      %p45 = por %p43, %p44
      %p47 = scmp.ne.s32.totalorder %s30, %s46
      %p48 = scmp.eq.s32.totalorder %s22, 0
      %p49 = por %p47, %p48
      %s51 = sadd.s32 %s50, 1
      %p54 = scmp.eq.s32.totalorder %s16, 3
      %p55 = scmp.ne.s32.totalorder %s50, %s52
      %p56 = scmp.eq.s32.totalorder %s16, 0
      %p57 = por %p55, %p56
      %p58 = scmp.ne.s32.totalorder %s50, %s52
      %p59 = scmp.eq.s32.totalorder %s21, 3
      %p60 = por %p58, %p59
      %p61 = scmp.ne.s32.totalorder %s52, %s53
      %p62 = scmp.eq.s32.totalorder %s21, 0
      %p63 = por %p61, %p62
      %p64 = scmp.ne.s32.totalorder %s52, %s53
      %p65 = scmp.eq.s32.totalorder %s22, 3
      %p66 = por %p64, %p65
      %p68 = scmp.ne.s32.totalorder %s53, %s67
      %p69 = scmp.eq.s32.totalorder %s22, 0
      %p70 = por %p68, %p69
      %s72 = sadd.s32 %s71, 1
      %p75 = scmp.eq.s32.totalorder %s16, 3
      %p76 = scmp.ne.s32.totalorder %s71, %s73
      %p77 = scmp.eq.s32.totalorder %s16, 0
      %p78 = por %p76, %p77
      %p79 = scmp.ne.s32.totalorder %s71, %s73
      %p80 = scmp.eq.s32.totalorder %s21, 3
      %p81 = por %p79, %p80
      %p82 = scmp.ne.s32.totalorder %s73, %s74
      %p83 = scmp.eq.s32.totalorder %s21, 0
      %p84 = por %p82, %p83
      %p85 = scmp.ne.s32.totalorder %s73, %s74
      %p86 = scmp.eq.s32.totalorder %s22, 3
      %p87 = por %p85, %p86
      %p89 = scmp.ne.s32.totalorder %s74, %s88
      %p90 = scmp.eq.s32.totalorder %s22, 0
      %p91 = por %p89, %p90
      %s93 = sadd.s32 %s92, 1
      %p96 = scmp.eq.s32.totalorder %s16, 3
      %p97 = scmp.ne.s32.totalorder %s92, %s94
      %p98 = scmp.eq.s32.totalorder %s16, 0
      %p99 = por %p97, %p98
      %p100 = scmp.ne.s32.totalorder %s92, %s94
      %p101 = scmp.eq.s32.totalorder %s21, 3
      %p102 = por %p100, %p101
      %p103 = scmp.ne.s32.totalorder %s94, %s95
      %p104 = scmp.eq.s32.totalorder %s21, 0
      %p105 = por %p103, %p104
      %p106 = scmp.ne.s32.totalorder %s94, %s95
      %p107 = scmp.eq.s32.totalorder %s22, 3
      %p108 = por %p106, %p107
      %p110 = scmp.ne.s32.totalorder %s95, %s109
      %p111 = scmp.eq.s32.totalorder %s22, 0
      %p112 = por %p110, %p111
      %s114 = sadd.s32 %s113, 1
      %p117 = scmp.eq.s32.totalorder %s16, 3
      %p118 = scmp.ne.s32.totalorder %s113, %s115
      %p119 = scmp.eq.s32.totalorder %s16, 0
      %p120 = por %p118, %p119
      %p121 = scmp.ne.s32.totalorder %s113, %s115
      %p122 = scmp.eq.s32.totalorder %s21, 3
      %p123 = por %p121, %p122
      %p124 = scmp.ne.s32.totalorder %s115, %s116
      %p125 = scmp.eq.s32.totalorder %s21, 0
      %p126 = por %p124, %p125
      %p127 = scmp.ne.s32.totalorder %s115, %s116
      %p128 = scmp.eq.s32.totalorder %s22, 3
      %p129 = por %p127, %p128
      %p131 = scmp.ne.s32.totalorder %s116, %s130
      %p132 = scmp.eq.s32.totalorder %s22, 0
      %p133 = por %p131, %p132
      %s135 = sadd.s32 %s134, 1
      %p138 = scmp.eq.s32.totalorder %s16, 3
      %p139 = scmp.ne.s32.totalorder %s134, %s136
      %p140 = scmp.eq.s32.totalorder %s16, 0
      %p141 = por %p139, %p140
      %p142 = scmp.ne.s32.totalorder %s134, %s136
      %p143 = scmp.eq.s32.totalorder %s21, 3
      %p144 = por %p142, %p143
      %p145 = scmp.ne.s32.totalorder %s136, %s137
      %p146 = scmp.eq.s32.totalorder %s21, 0
      %p147 = por %p145, %p146
      %p148 = scmp.ne.s32.totalorder %s136, %s137
      %p149 = scmp.eq.s32.totalorder %s22, 3
      %p150 = por %p148, %p149
      %p152 = scmp.ne.s32.totalorder %s137, %s151
      %p153 = scmp.eq.s32.totalorder %s22, 0
      %p154 = por %p152, %p153
      %s156 = sadd.s32 %s155, 1
      %p159 = scmp.eq.s32.totalorder %s16, 3
      %p160 = scmp.ne.s32.totalorder %s155, %s157
      %p161 = scmp.eq.s32.totalorder %s16, 0
      %p162 = por %p160, %p161
      %p163 = scmp.ne.s32.totalorder %s155, %s157
      %p164 = scmp.eq.s32.totalorder %s21, 3
      %p165 = por %p163, %p164
      %p166 = scmp.ne.s32.totalorder %s157, %s158
      %p167 = scmp.eq.s32.totalorder %s21, 0
      %p168 = por %p166, %p167
      %p169 = scmp.ne.s32.totalorder %s157, %s158
      %p170 = scmp.eq.s32.totalorder %s22, 3
      %p171 = por %p169, %p170
      %p173 = scmp.ne.s32.totalorder %s158, %s172
      %p174 = scmp.eq.s32.totalorder %s22, 0
      %p175 = por %p173, %p174
      %s176 = ssub.s32 %s16, %s23
      %p177 = scmp.eq.s32.totalorder %s176, 0
      %s179 = sadd.s32 %s178, 1
      %s180 = scalar_select %p177, %s178, %s179
      %p183 = pneg %p177
      %p184 = scmp.eq.s32.totalorder %s16, 3
      %p185 = por %p183, %p184
      %p186 = scmp.ne.s32.totalorder %s178, %s181
      %p187 = scmp.eq.s32.totalorder %s16, 0
      %p188 = por %p186, %p187
      %p189 = scmp.ne.s32.totalorder %s178, %s181
      %p190 = scmp.eq.s32.totalorder %s21, 3
      %p191 = por %p189, %p190
      %p192 = scmp.ne.s32.totalorder %s181, %s182
      %p193 = scmp.eq.s32.totalorder %s21, 0
      %p194 = por %p192, %p193
      %p195 = scmp.ne.s32.totalorder %s181, %s182
      %p196 = scmp.eq.s32.totalorder %s22, 3
      %p197 = por %p195, %p196
      %p199 = scmp.ne.s32.totalorder %s182, %s198
      %p200 = scmp.eq.s32.totalorder %s22, 0
      %p201 = por %p199, %p200
      %p202 = scmp.le.s32.totalorder 1, %s16
      %p203 = scmp.lt.s32.totalorder %s16, 5
      %p204 = pnand %p202, %p203
      %p205 = pneg %p204
      // Predicated region
      $region9: #{tpu_custom_call.1} parent=5 // pred_check
        _
      $region10: #{tpu_custom_call.1} parent=5 // pred_check_branch
        %207 = sbr.rel (%p204) target = $region12
      $region11: #{tpu_custom_call.1} parent=5 // pred_region
        %s208 = ssub.s32 %s16, 1
        // Predicated region
        $region13: #{tpu_custom_call.1} parent=11 // pred_check
          %p209 = pneg %p63
        $region14: #{tpu_custom_call.1} parent=11 // pred_check_branch
          %211 = sbr.rel (%p209) target = $region16
        $region15: #{tpu_custom_call.1} parent=11 // pred_region
          _
        $region16: #{tpu_custom_call.1} parent=11 // pred_fallthru
          _
        // Predicated region
        $region17: #{tpu_custom_call.1} parent=11 // pred_check
          %p212 = pneg %p84
        $region18: #{tpu_custom_call.1} parent=11 // pred_check_branch
          %214 = sbr.rel (%p212) target = $region20
        $region19: #{tpu_custom_call.1} parent=11 // pred_region
          _
        $region20: #{tpu_custom_call.1} parent=11 // pred_fallthru
          _
        // Predicated region
        $region21: #{tpu_custom_call.1} parent=11 // pred_check
          %p215 = pneg %p105
        $region22: #{tpu_custom_call.1} parent=11 // pred_check_branch
          %217 = sbr.rel (%p215) target = $region24
        $region23: #{tpu_custom_call.1} parent=11 // pred_region
          _
        $region24: #{tpu_custom_call.1} parent=11 // pred_fallthru
          _
        // Predicated region
        $region25: #{tpu_custom_call.1} parent=11 // pred_check
          %p218 = pneg %p126
        $region26: #{tpu_custom_call.1} parent=11 // pred_check_branch
          %220 = sbr.rel (%p218) target = $region28
        $region27: #{tpu_custom_call.1} parent=11 // pred_region
          _
        $region28: #{tpu_custom_call.1} parent=11 // pred_fallthru
          _
        // Predicated region
        $region29: #{tpu_custom_call.1} parent=11 // pred_check
          %p221 = pneg %p147
        $region30: #{tpu_custom_call.1} parent=11 // pred_check_branch
          %223 = sbr.rel (%p221) target = $region32
        $region31: #{tpu_custom_call.1} parent=11 // pred_region
          _
        $region32: #{tpu_custom_call.1} parent=11 // pred_fallthru
          _
        // Predicated region
        $region33: #{tpu_custom_call.1} parent=11 // pred_check
          %p224 = pneg %p168
        $region34: #{tpu_custom_call.1} parent=11 // pred_check_branch
          %226 = sbr.rel (%p224) target = $region36
        $region35: #{tpu_custom_call.1} parent=11 // pred_region
          _
        $region36: #{tpu_custom_call.1} parent=11 // pred_fallthru
          _
      $region12: #{tpu_custom_call.1} parent=5 // pred_fallthru
        _
      %p227 = scmp.lt.s32.totalorder %s16, 4
      // Predicated region
      $region37: #{tpu_custom_call.1} parent=5 // pred_check
        %p228 = pneg %p227
      $region38: #{tpu_custom_call.1} parent=5 // pred_check_branch
        %230 = sbr.rel (%p228) target = $region40
      $region39: #{tpu_custom_call.1} parent=5 // pred_region
        // Predicated region
        $region41: #{tpu_custom_call.1} parent=39 // pred_check
          %p231 = pneg %p36
        $region42: #{tpu_custom_call.1} parent=39 // pred_check_branch
          %233 = sbr.rel (%p231) target = $region44
        $region43: #{tpu_custom_call.1} parent=39 // pred_region
          %s234 = smul.u32 16, %s16
          %s235 = ssub.s32 63, %s234
          %p236 = scmp.lt.s32.totalorder %s235, 16
          %s237 = scalar_select %p236, %s235, 16
          %s238 = smul.u32 128, %s237
          %p239 = scmp.lt.s32.totalorder %s234, 62
          %s240 = scalar_select %p239, %s234, 62
          %s241 = smul.addr %s240, 8
          %s242 = scalar_lea.vmem %s0, %s241
          %s243 = smul.u32 16, %s16
          %s244 = ssub.s32 63, %s243
          %p245 = scmp.lt.s32.totalorder %s244, 16
          %s246 = scalar_select %p245, %s244, 16
          %s247 = smul.u32 128, %s246
        $region44: #{tpu_custom_call.1} parent=39 // pred_fallthru
          _
      $region40: #{tpu_custom_call.1} parent=5 // pred_fallthru
        _
      %p248 = scmp.le.s32.totalorder 1, %s16
      %p249 = scmp.lt.s32.totalorder %s16, 5
      %p250 = pnand %p248, %p249
      %p251 = pneg %p250
      // Predicated region
      $region45: #{tpu_custom_call.1} parent=5 // pred_check
        _
      $region46: #{tpu_custom_call.1} parent=5 // pred_check_branch
        %253 = sbr.rel (%p250) target = $region48
      $region47: #{tpu_custom_call.1} parent=5 // pred_region
        %s254 = ssub.s32 %s16, 1
        %s255 = smul.u32 16, %s21
        %s256 = ssub.s32 63, %s255
        %p257 = scmp.lt.s32.totalorder %s256, 16
        %s258 = scalar_select %p257, %s256, 16
        %s259 = smul.u32 128, %s258
        %p260 = scmp.lt.s32.totalorder %s255, 62
        %s261 = scalar_select %p260, %s255, 62
        %s262 = smul.addr %s261, 8
        %s263 = scalar_lea.vmem %s0, %s262
        %p264 = pneg %p42
        %p265 = pneg %p39
        %p266 = pneg %p63
        %p267 = pneg %p60
        %p268 = pneg %p84
        %p269 = pneg %p81
        %p270 = pneg %p105
        %p271 = pneg %p102
        %p272 = pneg %p126
        %p273 = pneg %p123
        %p274 = pneg %p147
        %p275 = pneg %p144
        %p276 = pneg %p168
        %p277 = pneg %p165
        %p278 = pneg %p194
        %p279 = pneg %p191
        %s280 = sand.u32 %s181, 1
        %s281 = scalar_lea.sflag [#allocation3], %s280
        %s282 = sand.u32 %s181, 1
        %s283 = smul.addr %s282, 128
        %s284 = scalar_lea.vmem [#allocation2], %s283
        %s285 = smul.u32 16, %s21
        %s286 = ssub.s32 63, %s285
        %p287 = scmp.lt.s32.totalorder %s286, 16
        %s288 = scalar_select %p287, %s286, 16
        %s289 = smul.u32 128, %s288
        %p290 = scmp.lt.s32.totalorder %s285, 62
        %s291 = scalar_select %p290, %s285, 62
        %s292 = smul.addr %s291, 8
        %s293 = scalar_lea.vmem %s0, %s292
        %s294 = smul.u32 16, %s21
        %s295 = ssub.s32 63, %s294
        %p296 = scmp.lt.s32.totalorder %s295, 16
        %s297 = scalar_select %p296, %s295, 16
        %s298 = smul.u32 128, %s297
        %s299 = smul.u32 16, %s21
        %s300 = ssub.s32 63, %s299
        %p301 = scmp.lt.s32.totalorder %s300, 16
        %s302 = scalar_select %p301, %s300, 16
        %s303 = smul.u32 128, %s302
        %v304 = vld [vmem:[%s293] sm:$0xff]
        %v305 = vld [vmem:[%s293 + $0x8] sm:$0xff]
        %v306 = vld [vmem:[%s293 + $0x10] sm:$0xff]
        %v307 = vld [vmem:[%s293 + $0x18] sm:$0xff]
        %v308 = vld [vmem:[%s293 + $0x20] sm:$0xff]
        %v309 = vld [vmem:[%s293 + $0x28] sm:$0xff]
        %v310 = vld [vmem:[%s293 + $0x30] sm:$0xff]
        %v311 = vld [vmem:[%s293 + $0x38] sm:$0xff]
        %v312 = vld [vmem:[%s293 + $0x40] sm:$0xff]
        %v313 = vld [vmem:[%s293 + $0x48] sm:$0xff]
        %v314 = vld [vmem:[%s293 + $0x50] sm:$0xff]
        %v315 = vld [vmem:[%s293 + $0x58] sm:$0xff]
        %v316 = vld [vmem:[%s293 + $0x60] sm:$0xff]
        %v317 = vld [vmem:[%s293 + $0x68] sm:$0xff]
        %v318 = vld [vmem:[%s293 + $0x70] sm:$0xff]
        %v319 = vld [vmem:[%s293 + $0x78] sm:$0xff]
        %v320 = vld [vmem:[%s1] sm:$0xff]
        %v321 = vld [vmem:[%s1 + $0x8] sm:$0xff]
        %v322 = vld [vmem:[%s1 + $0x10] sm:$0xff]
        %v323 = vld [vmem:[%s1 + $0x18] sm:$0xff]
        %v324 = vld [vmem:[%s2] sm:$0x1]
        %v326 = vlaneseq
        %v327 = vshrl.u32 %v326, 7
        %v328 = vsub.s32 0, %v327
        %v329 = vrot.slane %v324, %v328
        %vm331 = vcmask 261120
        %v333 = vsel %vm331, %v304, 0
        %v336 = vsel %vm331, %v305, 0
        %v339 = vsel %vm331, %v306, 0
        %v342 = vsel %vm331, %v307, 0
        %v345 = vsel %vm331, %v308, 0
        %v348 = vsel %vm331, %v309, 0
        %v351 = vsel %vm331, %v310, 0
        %v354 = vsel %vm331, %v311, 0
        %v357 = vsel %vm331, %v312, 0
        %v360 = vsel %vm331, %v313, 0
        %v363 = vsel %vm331, %v314, 0
        %v366 = vsel %vm331, %v315, 0
        %v369 = vsel %vm331, %v316, 0
        %v372 = vsel %vm331, %v317, 0
        %v375 = vsel %vm331, %v318, 0
        %v378 = vsel %vm331, %v319, 0
        %380 = vmatprep.subr.mxu0 0.0
        %381 = vmatpush1.msra.mxu0 0.0
        %382 = vmatprep.subr.mxu0 0.0
        %383 = vmatpush1.msra.mxu0 0.0
        %384 = vmatprep.subr.mxu0 0.0
        %385 = vmatpush1.msra.mxu0 0.0
        %386 = vmatprep.subr.mxu0 0.0
        %387 = vmatpush1.msra.mxu0 0.0
        %388 = vmatprep.subr.mxu0 0.0
        %389 = vmatpush1.msra.mxu0 0.0
        %390 = vmatprep.subr.mxu0 0.0
        %391 = vmatpush1.msra.mxu0 0.0
        %392 = vmatprep.subr.mxu0 0.0
        %393 = vmatpush1.msra.mxu0 0.0
        %394 = vmatprep.subr.mxu0 0.0
        %395 = vmatpush1.msra.mxu0 0.0
        %396 = vmatprep.subr.mxu0 0.0
        %397 = vmatpush1.msra.mxu0 0.0
        %398 = vmatprep.subr.mxu0 0.0
        %399 = vmatpush1.msra.mxu0 0.0
        %400 = vmatprep.subr.mxu0 0.0
        %401 = vmatpush1.msra.mxu0 0.0
        %402 = vmatprep.subr.mxu0 0.0
        %403 = vmatpush1.msra.mxu0 0.0
        %404 = vmatprep.subr.mxu0 0.0
        %405 = vmatpush1.msra.mxu0 %v323
        %406 = vmatprep.subr.mxu0 0.0
        %407 = vmatpush1.msra.mxu0 %v322
        %408 = vmatprep.subr.mxu0 0.0
        %409 = vmatpush1.msra.mxu0 %v321
        %410 = vmatprep.subr.mxu0 0.0
        %411 = vmatpush1.msra.mxu0 %v320
        %412 = vmatprep.subr.mxu0 0.0
        %413 = vmatpush2.msra.mxu0 0.0
        %414 = vmatprep.subr.mxu0 0.0
        %415 = vmatpush2.msra.mxu0 0.0
        %416 = vmatprep.subr.mxu0 0.0
        %417 = vmatpush2.msra.mxu0 0.0
        %418 = vmatprep.subr.mxu0 0.0
        %419 = vmatpush2.msra.mxu0 0.0
        %420 = vmatprep.subr.mxu0 0.0
        %421 = vmatpush2.msra.mxu0 0.0
        %422 = vmatprep.subr.mxu0 0.0
        %423 = vmatpush2.msra.mxu0 0.0
        %424 = vmatprep.subr.mxu0 0.0
        %425 = vmatpush2.msra.mxu0 0.0
        %426 = vmatprep.subr.mxu0 0.0
        %427 = vmatpush2.msra.mxu0 0.0
        %428 = vmatprep.subr.mxu0 0.0
        %429 = vmatpush2.msra.mxu0 0.0
        %430 = vmatprep.subr.mxu0 0.0
        %431 = vmatpush2.msra.mxu0 0.0
        %432 = vmatprep.subr.mxu0 0.0
        %433 = vmatpush2.msra.mxu0 0.0
        %434 = vmatprep.subr.mxu0 0.0
        %435 = vmatpush2.msra.mxu0 0.0
        %436 = vmatprep.subr.mxu0 0.0
        %437 = vmatpush2.msra.mxu0 0.0
        %438 = vmatprep.subr.mxu0 0.0
        %439 = vmatpush2.msra.mxu0 0.0
        %440 = vmatprep.subr.mxu0 0.0
        %441 = vmatpush2.msra.mxu0 0.0
        %442 = vmatprep.subr.mxu0 0.0
        %443 = vmatpush2.msra.mxu0 0.0
        %444 = vmatprep.mubr.f32.mxu0 0.0
        %445 = vmatmul.mubr.f32.gmra.mxu0 %v333
        %v446 = vpop.f32.mrf.mxu0
        %v447 = vadd.f32 %v329, %v446
        %v448 = vpop.f32.mrf.mxu0
        %449 = vmatprep.mubr.f32.mxu0 0.0
        %450 = vmatmul.mubr.f32.gmra.mxu0 %v336
        %v451 = vpop.f32.mrf.mxu0
        %v452 = vadd.f32 %v329, %v451
        %v453 = vpop.f32.mrf.mxu0
        %454 = vmatprep.mubr.f32.mxu0 0.0
        %455 = vmatmul.mubr.f32.gmra.mxu0 %v339
        %v456 = vpop.f32.mrf.mxu0
        %v457 = vadd.f32 %v329, %v456
        %v458 = vpop.f32.mrf.mxu0
        %459 = vmatprep.mubr.f32.mxu0 0.0
        %460 = vmatmul.mubr.f32.gmra.mxu0 %v342
        %v461 = vpop.f32.mrf.mxu0
        %v462 = vadd.f32 %v329, %v461
        %v463 = vpop.f32.mrf.mxu0
        %464 = vmatprep.mubr.f32.mxu0 0.0
        %465 = vmatmul.mubr.f32.gmra.mxu0 %v345
        %v466 = vpop.f32.mrf.mxu0
        %v467 = vadd.f32 %v329, %v466
        %v468 = vpop.f32.mrf.mxu0
        %469 = vmatprep.mubr.f32.mxu0 0.0
        %470 = vmatmul.mubr.f32.gmra.mxu0 %v348
        %v471 = vpop.f32.mrf.mxu0
        %v472 = vadd.f32 %v329, %v471
        %v473 = vpop.f32.mrf.mxu0
        %474 = vmatprep.mubr.f32.mxu0 0.0
        %475 = vmatmul.mubr.f32.gmra.mxu0 %v351
        %v476 = vpop.f32.mrf.mxu0
        %v477 = vadd.f32 %v329, %v476
        %v478 = vpop.f32.mrf.mxu0
        %479 = vmatprep.mubr.f32.mxu0 0.0
        %480 = vmatmul.mubr.f32.gmra.mxu0 %v354
        %v481 = vpop.f32.mrf.mxu0
        %v482 = vadd.f32 %v329, %v481
        %v483 = vpop.f32.mrf.mxu0
        %484 = vmatprep.mubr.f32.mxu0 0.0
        %485 = vmatmul.mubr.f32.gmra.mxu0 %v357
        %v486 = vpop.f32.mrf.mxu0
        %v487 = vadd.f32 %v329, %v486
        %v488 = vpop.f32.mrf.mxu0
        %489 = vmatprep.mubr.f32.mxu0 0.0
        %490 = vmatmul.mubr.f32.gmra.mxu0 %v360
        %v491 = vpop.f32.mrf.mxu0
        %v492 = vadd.f32 %v329, %v491
        %v493 = vpop.f32.mrf.mxu0
        %494 = vmatprep.mubr.f32.mxu0 0.0
        %495 = vmatmul.mubr.f32.gmra.mxu0 %v363
        %v496 = vpop.f32.mrf.mxu0
        %v497 = vadd.f32 %v329, %v496
        %v498 = vpop.f32.mrf.mxu0
        %499 = vmatprep.mubr.f32.mxu0 0.0
        %500 = vmatmul.mubr.f32.gmra.mxu0 %v366
        %v501 = vpop.f32.mrf.mxu0
        %v502 = vadd.f32 %v329, %v501
        %v503 = vpop.f32.mrf.mxu0
        %504 = vmatprep.mubr.f32.mxu0 0.0
        %505 = vmatmul.mubr.f32.gmra.mxu0 %v369
        %v506 = vpop.f32.mrf.mxu0
        %v507 = vadd.f32 %v329, %v506
        %v508 = vpop.f32.mrf.mxu0
        %509 = vmatprep.mubr.f32.mxu0 0.0
        %510 = vmatmul.mubr.f32.gmra.mxu0 %v372
        %v511 = vpop.f32.mrf.mxu0
        %v512 = vadd.f32 %v329, %v511
        %v513 = vpop.f32.mrf.mxu0
        %514 = vmatprep.mubr.f32.mxu0 0.0
        %515 = vmatmul.mubr.f32.gmra.mxu0 %v375
        %v516 = vpop.f32.mrf.mxu0
        %v517 = vadd.f32 %v329, %v516
        %v518 = vpop.f32.mrf.mxu0
        %519 = vmatprep.mubr.f32.mxu0 0.0
        %520 = vmatmul.mubr.f32.gmra.mxu0 %v378
        %v521 = vpop.f32.mrf.mxu0
        %v522 = vadd.f32 %v329, %v521
        %v523 = vpop.f32.mrf.mxu0
        %524 = vdwg.mxu0
        %v525 = vmin.f32 %v447, 20.0
        %v526 = vmin.f32 %v452, 20.0
        %v527 = vmin.f32 %v457, 20.0
        %v528 = vmin.f32 %v462, 20.0
        %v529 = vmin.f32 %v467, 20.0
        %v530 = vmin.f32 %v472, 20.0
        %v531 = vmin.f32 %v477, 20.0
        %v532 = vmin.f32 %v482, 20.0
        %v533 = vmin.f32 %v487, 20.0
        %v534 = vmin.f32 %v492, 20.0
        %v535 = vmin.f32 %v497, 20.0
        %v536 = vmin.f32 %v502, 20.0
        %v537 = vmin.f32 %v507, 20.0
        %v538 = vmin.f32 %v512, 20.0
        %v539 = vmin.f32 %v517, 20.0
        %v540 = vmin.f32 %v522, 20.0
        %v541 = vmul.f32 %v525, 1.442695
        %v542 = vpow.pop %v541
        %v543 = vmul.f32 %v526, 1.442695
        %v544 = vpow.pop %v543
        %v545 = vmul.f32 %v527, 1.442695
        %v546 = vpow.pop %v545
        %v547 = vmul.f32 %v528, 1.442695
        %v548 = vpow.pop %v547
        %v549 = vmul.f32 %v529, 1.442695
        %v550 = vpow.pop %v549
        %v551 = vmul.f32 %v530, 1.442695
        %v552 = vpow.pop %v551
        %v553 = vmul.f32 %v531, 1.442695
        %v554 = vpow.pop %v553
        %v555 = vmul.f32 %v532, 1.442695
        %v556 = vpow.pop %v555
        %v557 = vmul.f32 %v533, 1.442695
        %v558 = vpow.pop %v557
        %v559 = vmul.f32 %v534, 1.442695
        %v560 = vpow.pop %v559
        %v561 = vmul.f32 %v535, 1.442695
        %v562 = vpow.pop %v561
        %v563 = vmul.f32 %v536, 1.442695
        %v564 = vpow.pop %v563
        %v565 = vmul.f32 %v537, 1.442695
        %v566 = vpow.pop %v565
        %v567 = vmul.f32 %v538, 1.442695
        %v568 = vpow.pop %v567
        %v569 = vmul.f32 %v539, 1.442695
        %v570 = vpow.pop %v569
        %v571 = vmul.f32 %v540, 1.442695
        %v572 = vpow.pop %v571
        %v573 = vadd.f32 %v542, 2.0
        %v574 = vadd.f32 %v544, 2.0
        %v575 = vadd.f32 %v546, 2.0
        %v576 = vadd.f32 %v548, 2.0
        %v577 = vadd.f32 %v550, 2.0
        %v578 = vadd.f32 %v552, 2.0
        %v579 = vadd.f32 %v554, 2.0
        %v580 = vadd.f32 %v556, 2.0
        %v581 = vadd.f32 %v558, 2.0
        %v582 = vadd.f32 %v560, 2.0
        %v583 = vadd.f32 %v562, 2.0
        %v584 = vadd.f32 %v564, 2.0
        %v585 = vadd.f32 %v566, 2.0
        %v586 = vadd.f32 %v568, 2.0
        %v587 = vadd.f32 %v570, 2.0
        %v588 = vadd.f32 %v572, 2.0
        %v589 = vmul.f32 %v542, %v573
        %v590 = vmul.f32 %v544, %v574
        %v591 = vmul.f32 %v546, %v575
        %v592 = vmul.f32 %v548, %v576
        %v593 = vmul.f32 %v550, %v577
        %v594 = vmul.f32 %v552, %v578
        %v595 = vmul.f32 %v554, %v579
        %v596 = vmul.f32 %v556, %v580
        %v597 = vmul.f32 %v558, %v581
        %v598 = vmul.f32 %v560, %v582
        %v599 = vmul.f32 %v562, %v583
        %v600 = vmul.f32 %v564, %v584
        %v601 = vmul.f32 %v566, %v585
        %v602 = vmul.f32 %v568, %v586
        %v603 = vmul.f32 %v570, %v587
        %v604 = vmul.f32 %v572, %v588
        %vm605 = vcmp.gt.f32.partialorder %v447, 20.0
        %vm606 = vcmp.gt.f32.partialorder %v452, 20.0
        %vm607 = vcmp.gt.f32.partialorder %v457, 20.0
        %vm608 = vcmp.gt.f32.partialorder %v462, 20.0
        %vm609 = vcmp.gt.f32.partialorder %v467, 20.0
        %vm610 = vcmp.gt.f32.partialorder %v472, 20.0
        %vm611 = vcmp.gt.f32.partialorder %v477, 20.0
        %vm612 = vcmp.gt.f32.partialorder %v482, 20.0
        %vm613 = vcmp.gt.f32.partialorder %v487, 20.0
        %vm614 = vcmp.gt.f32.partialorder %v492, 20.0
        %vm615 = vcmp.gt.f32.partialorder %v497, 20.0
        %vm616 = vcmp.gt.f32.partialorder %v502, 20.0
        %vm617 = vcmp.gt.f32.partialorder %v507, 20.0
        %vm618 = vcmp.gt.f32.partialorder %v512, 20.0
        %vm619 = vcmp.gt.f32.partialorder %v517, 20.0
        %vm620 = vcmp.gt.f32.partialorder %v522, 20.0
        %v621 = vadd.f32 %v589, 2.0
        %v622 = vadd.f32 %v590, 2.0
        %v623 = vadd.f32 %v591, 2.0
        %v624 = vadd.f32 %v592, 2.0
        %v625 = vadd.f32 %v593, 2.0
        %v626 = vadd.f32 %v594, 2.0
        %v627 = vadd.f32 %v595, 2.0
        %v628 = vadd.f32 %v596, 2.0
        %v629 = vadd.f32 %v597, 2.0
        %v630 = vadd.f32 %v598, 2.0
        %v631 = vadd.f32 %v599, 2.0
        %v632 = vadd.f32 %v600, 2.0
        %v633 = vadd.f32 %v601, 2.0
        %v634 = vadd.f32 %v602, 2.0
        %v635 = vadd.f32 %v603, 2.0
        %v636 = vadd.f32 %v604, 2.0
        %v637 = vrcp.pop %v621
        %v638 = vmul.f32 %v589, %v637
        %v639 = vrcp.pop %v622
        %v640 = vmul.f32 %v590, %v639
        %v641 = vrcp.pop %v623
        %v642 = vmul.f32 %v591, %v641
        %v643 = vrcp.pop %v624
        %v644 = vmul.f32 %v592, %v643
        %v645 = vrcp.pop %v625
        %v646 = vmul.f32 %v593, %v645
        %v647 = vrcp.pop %v626
        %v648 = vmul.f32 %v594, %v647
        %v649 = vrcp.pop %v627
        %v650 = vmul.f32 %v595, %v649
        %v651 = vrcp.pop %v628
        %v652 = vmul.f32 %v596, %v651
        %v653 = vrcp.pop %v629
        %v654 = vmul.f32 %v597, %v653
        %v655 = vrcp.pop %v630
        %v656 = vmul.f32 %v598, %v655
        %v657 = vrcp.pop %v631
        %v658 = vmul.f32 %v599, %v657
        %v659 = vrcp.pop %v632
        %v660 = vmul.f32 %v600, %v659
        %v661 = vrcp.pop %v633
        %v662 = vmul.f32 %v601, %v661
        %v663 = vrcp.pop %v634
        %v664 = vmul.f32 %v602, %v663
        %v665 = vrcp.pop %v635
        %v666 = vmul.f32 %v603, %v665
        %v667 = vrcp.pop %v636
        %v668 = vmul.f32 %v604, %v667
        %v669 = vmul.f32 %v447, %v638
        %v670 = vmul.f32 %v452, %v640
        %v671 = vmul.f32 %v457, %v642
        %v672 = vmul.f32 %v462, %v644
        %v673 = vmul.f32 %v467, %v646
        %v674 = vmul.f32 %v472, %v648
        %v675 = vmul.f32 %v477, %v650
        %v676 = vmul.f32 %v482, %v652
        %v677 = vmul.f32 %v487, %v654
        %v678 = vmul.f32 %v492, %v656
        %v679 = vmul.f32 %v497, %v658
        %v680 = vmul.f32 %v502, %v660
        %v681 = vmul.f32 %v507, %v662
        %v682 = vmul.f32 %v512, %v664
        %v683 = vmul.f32 %v517, %v666
        %v684 = vmul.f32 %v522, %v668
        %v685 = vsel %vm605, %v447, %v669
        %v686 = vsel %vm606, %v452, %v670
        %v687 = vsel %vm607, %v457, %v671
        %v688 = vsel %vm608, %v462, %v672
        %v689 = vsel %vm609, %v467, %v673
        %v690 = vsel %vm610, %v472, %v674
        %v691 = vsel %vm611, %v477, %v675
        %v692 = vsel %vm612, %v482, %v676
        %v693 = vsel %vm613, %v487, %v677
        %v694 = vsel %vm614, %v492, %v678
        %v695 = vsel %vm615, %v497, %v679
        %v696 = vsel %vm616, %v502, %v680
        %v697 = vsel %vm617, %v507, %v681
        %v698 = vsel %vm618, %v512, %v682
        %v699 = vsel %vm619, %v517, %v683
        %v700 = vsel %vm620, %v522, %v684
        %v701 = vld [vmem:[%s3] sm:$0xff]
        %v702 = vld [vmem:[%s3 + $0x8] sm:$0xff]
        %v703 = vld [vmem:[%s3 + $0x10] sm:$0xff]
        %v704 = vld [vmem:[%s3 + $0x18] sm:$0xff]
        %v705 = vld [vmem:[%s4] sm:$0x1]
        %v707 = vlaneseq
        %v708 = vshrl.u32 %v707, 7
        %v709 = vsub.s32 0, %v708
        %v710 = vrot.slane %v705, %v709
        %v713 = vsel %vm331, %v685, 0
        %v716 = vsel %vm331, %v686, 0
        %v719 = vsel %vm331, %v687, 0
        %v722 = vsel %vm331, %v688, 0
        %v725 = vsel %vm331, %v689, 0
        %v728 = vsel %vm331, %v690, 0
        %v731 = vsel %vm331, %v691, 0
        %v734 = vsel %vm331, %v692, 0
        %v737 = vsel %vm331, %v693, 0
        %v740 = vsel %vm331, %v694, 0
        %v743 = vsel %vm331, %v695, 0
        %v746 = vsel %vm331, %v696, 0
        %v749 = vsel %vm331, %v697, 0
        %v752 = vsel %vm331, %v698, 0
        %v755 = vsel %vm331, %v699, 0
        %v758 = vsel %vm331, %v700, 0
        %760 = vmatprep.subr.mxu0 0.0
        %761 = vmatpush1.msra.mxu0 0.0
        %762 = vmatprep.subr.mxu0 0.0
        %763 = vmatpush1.msra.mxu0 0.0
        %764 = vmatprep.subr.mxu0 0.0
        %765 = vmatpush1.msra.mxu0 0.0
        %766 = vmatprep.subr.mxu0 0.0
        %767 = vmatpush1.msra.mxu0 0.0
        %768 = vmatprep.subr.mxu0 0.0
        %769 = vmatpush1.msra.mxu0 0.0
        %770 = vmatprep.subr.mxu0 0.0
        %771 = vmatpush1.msra.mxu0 0.0
        %772 = vmatprep.subr.mxu0 0.0
        %773 = vmatpush1.msra.mxu0 0.0
        %774 = vmatprep.subr.mxu0 0.0
        %775 = vmatpush1.msra.mxu0 0.0
        %776 = vmatprep.subr.mxu0 0.0
        %777 = vmatpush1.msra.mxu0 0.0
        %778 = vmatprep.subr.mxu0 0.0
        %779 = vmatpush1.msra.mxu0 0.0
        %780 = vmatprep.subr.mxu0 0.0
        %781 = vmatpush1.msra.mxu0 0.0
        %782 = vmatprep.subr.mxu0 0.0
        %783 = vmatpush1.msra.mxu0 0.0
        %784 = vmatprep.subr.mxu0 0.0
        %785 = vmatpush1.msra.mxu0 %v704
        %786 = vmatprep.subr.mxu0 0.0
        %787 = vmatpush1.msra.mxu0 %v703
        %788 = vmatprep.subr.mxu0 0.0
        %789 = vmatpush1.msra.mxu0 %v702
        %790 = vmatprep.subr.mxu0 0.0
        %791 = vmatpush1.msra.mxu0 %v701
        %792 = vmatprep.subr.mxu0 0.0
        %793 = vmatpush2.msra.mxu0 0.0
        %794 = vmatprep.subr.mxu0 0.0
        %795 = vmatpush2.msra.mxu0 0.0
        %796 = vmatprep.subr.mxu0 0.0
        %797 = vmatpush2.msra.mxu0 0.0
        %798 = vmatprep.subr.mxu0 0.0
        %799 = vmatpush2.msra.mxu0 0.0
        %800 = vmatprep.subr.mxu0 0.0
        %801 = vmatpush2.msra.mxu0 0.0
        %802 = vmatprep.subr.mxu0 0.0
        %803 = vmatpush2.msra.mxu0 0.0
        %804 = vmatprep.subr.mxu0 0.0
        %805 = vmatpush2.msra.mxu0 0.0
        %806 = vmatprep.subr.mxu0 0.0
        %807 = vmatpush2.msra.mxu0 0.0
        %808 = vmatprep.subr.mxu0 0.0
        %809 = vmatpush2.msra.mxu0 0.0
        %810 = vmatprep.subr.mxu0 0.0
        %811 = vmatpush2.msra.mxu0 0.0
        %812 = vmatprep.subr.mxu0 0.0
        %813 = vmatpush2.msra.mxu0 0.0
        %814 = vmatprep.subr.mxu0 0.0
        %815 = vmatpush2.msra.mxu0 0.0
        %816 = vmatprep.subr.mxu0 0.0
        %817 = vmatpush2.msra.mxu0 0.0
        %818 = vmatprep.subr.mxu0 0.0
        %819 = vmatpush2.msra.mxu0 0.0
        %820 = vmatprep.subr.mxu0 0.0
        %821 = vmatpush2.msra.mxu0 0.0
        %822 = vmatprep.subr.mxu0 0.0
        %823 = vmatpush2.msra.mxu0 0.0
        %824 = vmatprep.mubr.f32.mxu0 0.0
        %825 = vmatmul.mubr.f32.gmra.mxu0 %v713
        %v826 = vpop.f32.mrf.mxu0
        %v827 = vadd.f32 %v710, %v826
        %v828 = vpop.f32.mrf.mxu0
        %829 = vmatprep.mubr.f32.mxu0 0.0
        %830 = vmatmul.mubr.f32.gmra.mxu0 %v716
        %v831 = vpop.f32.mrf.mxu0
        %v832 = vadd.f32 %v710, %v831
        %v833 = vpop.f32.mrf.mxu0
        %834 = vmatprep.mubr.f32.mxu0 0.0
        %835 = vmatmul.mubr.f32.gmra.mxu0 %v719
        %v836 = vpop.f32.mrf.mxu0
        %v837 = vadd.f32 %v710, %v836
        %v838 = vpop.f32.mrf.mxu0
        %839 = vmatprep.mubr.f32.mxu0 0.0
        %840 = vmatmul.mubr.f32.gmra.mxu0 %v722
        %v841 = vpop.f32.mrf.mxu0
        %v842 = vadd.f32 %v710, %v841
        %v843 = vpop.f32.mrf.mxu0
        %844 = vmatprep.mubr.f32.mxu0 0.0
        %845 = vmatmul.mubr.f32.gmra.mxu0 %v725
        %v846 = vpop.f32.mrf.mxu0
        %v847 = vadd.f32 %v710, %v846
        %v848 = vpop.f32.mrf.mxu0
        %849 = vmatprep.mubr.f32.mxu0 0.0
        %850 = vmatmul.mubr.f32.gmra.mxu0 %v728
        %v851 = vpop.f32.mrf.mxu0
        %v852 = vadd.f32 %v710, %v851
        %v853 = vpop.f32.mrf.mxu0
        %854 = vmatprep.mubr.f32.mxu0 0.0
        %855 = vmatmul.mubr.f32.gmra.mxu0 %v731
        %v856 = vpop.f32.mrf.mxu0
        %v857 = vadd.f32 %v710, %v856
        %v858 = vpop.f32.mrf.mxu0
        %859 = vmatprep.mubr.f32.mxu0 0.0
        %860 = vmatmul.mubr.f32.gmra.mxu0 %v734
        %v861 = vpop.f32.mrf.mxu0
        %v862 = vadd.f32 %v710, %v861
        %v863 = vpop.f32.mrf.mxu0
        %864 = vmatprep.mubr.f32.mxu0 0.0
        %865 = vmatmul.mubr.f32.gmra.mxu0 %v737
        %v866 = vpop.f32.mrf.mxu0
        %v867 = vadd.f32 %v710, %v866
        %v868 = vpop.f32.mrf.mxu0
        %869 = vmatprep.mubr.f32.mxu0 0.0
        %870 = vmatmul.mubr.f32.gmra.mxu0 %v740
        %v871 = vpop.f32.mrf.mxu0
        %v872 = vadd.f32 %v710, %v871
        %v873 = vpop.f32.mrf.mxu0
        %874 = vmatprep.mubr.f32.mxu0 0.0
        %875 = vmatmul.mubr.f32.gmra.mxu0 %v743
        %v876 = vpop.f32.mrf.mxu0
        %v877 = vadd.f32 %v710, %v876
        %v878 = vpop.f32.mrf.mxu0
        %879 = vmatprep.mubr.f32.mxu0 0.0
        %880 = vmatmul.mubr.f32.gmra.mxu0 %v746
        %v881 = vpop.f32.mrf.mxu0
        %v882 = vadd.f32 %v710, %v881
        %v883 = vpop.f32.mrf.mxu0
        %884 = vmatprep.mubr.f32.mxu0 0.0
        %885 = vmatmul.mubr.f32.gmra.mxu0 %v749
        %v886 = vpop.f32.mrf.mxu0
        %v887 = vadd.f32 %v710, %v886
        %v888 = vpop.f32.mrf.mxu0
        %889 = vmatprep.mubr.f32.mxu0 0.0
        %890 = vmatmul.mubr.f32.gmra.mxu0 %v752
        %v891 = vpop.f32.mrf.mxu0
        %v892 = vadd.f32 %v710, %v891
        %v893 = vpop.f32.mrf.mxu0
        %894 = vmatprep.mubr.f32.mxu0 0.0
        %895 = vmatmul.mubr.f32.gmra.mxu0 %v755
        %v896 = vpop.f32.mrf.mxu0
        %v897 = vadd.f32 %v710, %v896
        %v898 = vpop.f32.mrf.mxu0
        %899 = vmatprep.mubr.f32.mxu0 0.0
        %900 = vmatmul.mubr.f32.gmra.mxu0 %v758
        %v901 = vpop.f32.mrf.mxu0
        %v902 = vadd.f32 %v710, %v901
        %v903 = vpop.f32.mrf.mxu0
        %904 = vdwg.mxu0
        %v905 = vmin.f32 %v827, 20.0
        %v906 = vmin.f32 %v832, 20.0
        %v907 = vmin.f32 %v837, 20.0
        %v908 = vmin.f32 %v842, 20.0
        %v909 = vmin.f32 %v847, 20.0
        %v910 = vmin.f32 %v852, 20.0
        %v911 = vmin.f32 %v857, 20.0
        %v912 = vmin.f32 %v862, 20.0
        %v913 = vmin.f32 %v867, 20.0
        %v914 = vmin.f32 %v872, 20.0
        %v915 = vmin.f32 %v877, 20.0
        %v916 = vmin.f32 %v882, 20.0
        %v917 = vmin.f32 %v887, 20.0
        %v918 = vmin.f32 %v892, 20.0
        %v919 = vmin.f32 %v897, 20.0
        %v920 = vmin.f32 %v902, 20.0
        %v921 = vmul.f32 %v905, 1.442695
        %v922 = vpow.pop %v921
        %v923 = vmul.f32 %v906, 1.442695
        %v924 = vpow.pop %v923
        %v925 = vmul.f32 %v907, 1.442695
        %v926 = vpow.pop %v925
        %v927 = vmul.f32 %v908, 1.442695
        %v928 = vpow.pop %v927
        %v929 = vmul.f32 %v909, 1.442695
        %v930 = vpow.pop %v929
        %v931 = vmul.f32 %v910, 1.442695
        %v932 = vpow.pop %v931
        %v933 = vmul.f32 %v911, 1.442695
        %v934 = vpow.pop %v933
        %v935 = vmul.f32 %v912, 1.442695
        %v936 = vpow.pop %v935
        %v937 = vmul.f32 %v913, 1.442695
        %v938 = vpow.pop %v937
        %v939 = vmul.f32 %v914, 1.442695
        %v940 = vpow.pop %v939
        %v941 = vmul.f32 %v915, 1.442695
        %v942 = vpow.pop %v941
        %v943 = vmul.f32 %v916, 1.442695
        %v944 = vpow.pop %v943
        %v945 = vmul.f32 %v917, 1.442695
        %v946 = vpow.pop %v945
        %v947 = vmul.f32 %v918, 1.442695
        %v948 = vpow.pop %v947
        %v949 = vmul.f32 %v919, 1.442695
        %v950 = vpow.pop %v949
        %v951 = vmul.f32 %v920, 1.442695
        %v952 = vpow.pop %v951
        %v953 = vadd.f32 %v922, 2.0
        %v954 = vadd.f32 %v924, 2.0
        %v955 = vadd.f32 %v926, 2.0
        %v956 = vadd.f32 %v928, 2.0
        %v957 = vadd.f32 %v930, 2.0
        %v958 = vadd.f32 %v932, 2.0
        %v959 = vadd.f32 %v934, 2.0
        %v960 = vadd.f32 %v936, 2.0
        %v961 = vadd.f32 %v938, 2.0
        %v962 = vadd.f32 %v940, 2.0
        %v963 = vadd.f32 %v942, 2.0
        %v964 = vadd.f32 %v944, 2.0
        %v965 = vadd.f32 %v946, 2.0
        %v966 = vadd.f32 %v948, 2.0
        %v967 = vadd.f32 %v950, 2.0
        %v968 = vadd.f32 %v952, 2.0
        %v969 = vmul.f32 %v922, %v953
        %v970 = vmul.f32 %v924, %v954
        %v971 = vmul.f32 %v926, %v955
        %v972 = vmul.f32 %v928, %v956
        %v973 = vmul.f32 %v930, %v957
        %v974 = vmul.f32 %v932, %v958
        %v975 = vmul.f32 %v934, %v959
        %v976 = vmul.f32 %v936, %v960
        %v977 = vmul.f32 %v938, %v961
        %v978 = vmul.f32 %v940, %v962
        %v979 = vmul.f32 %v942, %v963
        %v980 = vmul.f32 %v944, %v964
        %v981 = vmul.f32 %v946, %v965
        %v982 = vmul.f32 %v948, %v966
        %v983 = vmul.f32 %v950, %v967
        %v984 = vmul.f32 %v952, %v968
        %vm985 = vcmp.gt.f32.partialorder %v827, 20.0
        %vm986 = vcmp.gt.f32.partialorder %v832, 20.0
        %vm987 = vcmp.gt.f32.partialorder %v837, 20.0
        %vm988 = vcmp.gt.f32.partialorder %v842, 20.0
        %vm989 = vcmp.gt.f32.partialorder %v847, 20.0
        %vm990 = vcmp.gt.f32.partialorder %v852, 20.0
        %vm991 = vcmp.gt.f32.partialorder %v857, 20.0
        %vm992 = vcmp.gt.f32.partialorder %v862, 20.0
        %vm993 = vcmp.gt.f32.partialorder %v867, 20.0
        %vm994 = vcmp.gt.f32.partialorder %v872, 20.0
        %vm995 = vcmp.gt.f32.partialorder %v877, 20.0
        %vm996 = vcmp.gt.f32.partialorder %v882, 20.0
        %vm997 = vcmp.gt.f32.partialorder %v887, 20.0
        %vm998 = vcmp.gt.f32.partialorder %v892, 20.0
        %vm999 = vcmp.gt.f32.partialorder %v897, 20.0
        %vm1000 = vcmp.gt.f32.partialorder %v902, 20.0
        %v1001 = vadd.f32 %v969, 2.0
        %v1002 = vadd.f32 %v970, 2.0
        %v1003 = vadd.f32 %v971, 2.0
        %v1004 = vadd.f32 %v972, 2.0
        %v1005 = vadd.f32 %v973, 2.0
        %v1006 = vadd.f32 %v974, 2.0
        %v1007 = vadd.f32 %v975, 2.0
        %v1008 = vadd.f32 %v976, 2.0
        %v1009 = vadd.f32 %v977, 2.0
        %v1010 = vadd.f32 %v978, 2.0
        %v1011 = vadd.f32 %v979, 2.0
        %v1012 = vadd.f32 %v980, 2.0
        %v1013 = vadd.f32 %v981, 2.0
        %v1014 = vadd.f32 %v982, 2.0
        %v1015 = vadd.f32 %v983, 2.0
        %v1016 = vadd.f32 %v984, 2.0
        %v1017 = vrcp.pop %v1001
        %v1018 = vmul.f32 %v969, %v1017
        %v1019 = vrcp.pop %v1002
        %v1020 = vmul.f32 %v970, %v1019
        %v1021 = vrcp.pop %v1003
        %v1022 = vmul.f32 %v971, %v1021
        %v1023 = vrcp.pop %v1004
        %v1024 = vmul.f32 %v972, %v1023
        %v1025 = vrcp.pop %v1005
        %v1026 = vmul.f32 %v973, %v1025
        %v1027 = vrcp.pop %v1006
        %v1028 = vmul.f32 %v974, %v1027
        %v1029 = vrcp.pop %v1007
        %v1030 = vmul.f32 %v975, %v1029
        %v1031 = vrcp.pop %v1008
        %v1032 = vmul.f32 %v976, %v1031
        %v1033 = vrcp.pop %v1009
        %v1034 = vmul.f32 %v977, %v1033
        %v1035 = vrcp.pop %v1010
        %v1036 = vmul.f32 %v978, %v1035
        %v1037 = vrcp.pop %v1011
        %v1038 = vmul.f32 %v979, %v1037
        %v1039 = vrcp.pop %v1012
        %v1040 = vmul.f32 %v980, %v1039
        %v1041 = vrcp.pop %v1013
        %v1042 = vmul.f32 %v981, %v1041
        %v1043 = vrcp.pop %v1014
        %v1044 = vmul.f32 %v982, %v1043
        %v1045 = vrcp.pop %v1015
        %v1046 = vmul.f32 %v983, %v1045
        %v1047 = vrcp.pop %v1016
        %v1048 = vmul.f32 %v984, %v1047
        %v1049 = vmul.f32 %v827, %v1018
        %v1050 = vmul.f32 %v832, %v1020
        %v1051 = vmul.f32 %v837, %v1022
        %v1052 = vmul.f32 %v842, %v1024
        %v1053 = vmul.f32 %v847, %v1026
        %v1054 = vmul.f32 %v852, %v1028
        %v1055 = vmul.f32 %v857, %v1030
        %v1056 = vmul.f32 %v862, %v1032
        %v1057 = vmul.f32 %v867, %v1034
        %v1058 = vmul.f32 %v872, %v1036
        %v1059 = vmul.f32 %v877, %v1038
        %v1060 = vmul.f32 %v882, %v1040
        %v1061 = vmul.f32 %v887, %v1042
        %v1062 = vmul.f32 %v892, %v1044
        %v1063 = vmul.f32 %v897, %v1046
        %v1064 = vmul.f32 %v902, %v1048
        %v1065 = vsel %vm985, %v827, %v1049
        %v1066 = vsel %vm986, %v832, %v1050
        %v1067 = vsel %vm987, %v837, %v1051
        %v1068 = vsel %vm988, %v842, %v1052
        %v1069 = vsel %vm989, %v847, %v1053
        %v1070 = vsel %vm990, %v852, %v1054
        %v1071 = vsel %vm991, %v857, %v1055
        %v1072 = vsel %vm992, %v862, %v1056
        %v1073 = vsel %vm993, %v867, %v1057
        %v1074 = vsel %vm994, %v872, %v1058
        %v1075 = vsel %vm995, %v877, %v1059
        %v1076 = vsel %vm996, %v882, %v1060
        %v1077 = vsel %vm997, %v887, %v1061
        %v1078 = vsel %vm998, %v892, %v1062
        %v1079 = vsel %vm999, %v897, %v1063
        %v1080 = vsel %vm1000, %v902, %v1064
        %v1081 = vld [vmem:[%s5] sm:$0xff]
        %v1082 = vld [vmem:[%s5 + $0x8] sm:$0xff]
        %v1083 = vld [vmem:[%s5 + $0x10] sm:$0xff]
        %v1084 = vld [vmem:[%s5 + $0x18] sm:$0xff]
        %v1085 = vld [vmem:[%s5 + $0x20] sm:$0xff]
        %v1086 = vld [vmem:[%s5 + $0x28] sm:$0xff]
        %v1087 = vld [vmem:[%s5 + $0x30] sm:$0xff]
        %v1088 = vld [vmem:[%s5 + $0x38] sm:$0xff]
        %v1089 = vld [vmem:[%s6] sm:$0x1]
        %v1091 = vlaneseq
        %v1092 = vshrl.u32 %v1091, 7
        %v1093 = vsub.s32 0, %v1092
        %v1094 = vrot.slane %v1089, %v1093
        %vm1096 = vcmask 523264
        %v1098 = vsel %vm1096, %v1065, 0
        %v1101 = vsel %vm1096, %v1066, 0
        %v1104 = vsel %vm1096, %v1067, 0
        %v1107 = vsel %vm1096, %v1068, 0
        %v1110 = vsel %vm1096, %v1069, 0
        %v1113 = vsel %vm1096, %v1070, 0
        %v1116 = vsel %vm1096, %v1071, 0
        %v1119 = vsel %vm1096, %v1072, 0
        %v1122 = vsel %vm1096, %v1073, 0
        %v1125 = vsel %vm1096, %v1074, 0
        %v1128 = vsel %vm1096, %v1075, 0
        %v1131 = vsel %vm1096, %v1076, 0
        %v1134 = vsel %vm1096, %v1077, 0
        %v1137 = vsel %vm1096, %v1078, 0
        %v1140 = vsel %vm1096, %v1079, 0
        %v1143 = vsel %vm1096, %v1080, 0
        %1145 = vmatprep.subr.mxu0 0.0
        %1146 = vmatpush1.msra.mxu0 0.0
        %1147 = vmatprep.subr.mxu0 0.0
        %1148 = vmatpush1.msra.mxu0 0.0
        %1149 = vmatprep.subr.mxu0 0.0
        %1150 = vmatpush1.msra.mxu0 0.0
        %1151 = vmatprep.subr.mxu0 0.0
        %1152 = vmatpush1.msra.mxu0 0.0
        %1153 = vmatprep.subr.mxu0 0.0
        %1154 = vmatpush1.msra.mxu0 0.0
        %1155 = vmatprep.subr.mxu0 0.0
        %1156 = vmatpush1.msra.mxu0 0.0
        %1157 = vmatprep.subr.mxu0 0.0
        %1158 = vmatpush1.msra.mxu0 0.0
        %1159 = vmatprep.subr.mxu0 0.0
        %1160 = vmatpush1.msra.mxu0 0.0
        %1161 = vmatprep.subr.mxu0 0.0
        %1162 = vmatpush1.msra.mxu0 %v1088
        %1163 = vmatprep.subr.mxu0 0.0
        %1164 = vmatpush1.msra.mxu0 %v1087
        %1165 = vmatprep.subr.mxu0 0.0
        %1166 = vmatpush1.msra.mxu0 %v1086
        %1167 = vmatprep.subr.mxu0 0.0
        %1168 = vmatpush1.msra.mxu0 %v1085
        %1169 = vmatprep.subr.mxu0 0.0
        %1170 = vmatpush1.msra.mxu0 %v1084
        %1171 = vmatprep.subr.mxu0 0.0
        %1172 = vmatpush1.msra.mxu0 %v1083
        %1173 = vmatprep.subr.mxu0 0.0
        %1174 = vmatpush1.msra.mxu0 %v1082
        %1175 = vmatprep.subr.mxu0 0.0
        %1176 = vmatpush1.msra.mxu0 %v1081
        %1177 = vmatprep.subr.mxu0 0.0
        %1178 = vmatpush2.msra.mxu0 0.0
        %1179 = vmatprep.subr.mxu0 0.0
        %1180 = vmatpush2.msra.mxu0 0.0
        %1181 = vmatprep.subr.mxu0 0.0
        %1182 = vmatpush2.msra.mxu0 0.0
        %1183 = vmatprep.subr.mxu0 0.0
        %1184 = vmatpush2.msra.mxu0 0.0
        %1185 = vmatprep.subr.mxu0 0.0
        %1186 = vmatpush2.msra.mxu0 0.0
        %1187 = vmatprep.subr.mxu0 0.0
        %1188 = vmatpush2.msra.mxu0 0.0
        %1189 = vmatprep.subr.mxu0 0.0
        %1190 = vmatpush2.msra.mxu0 0.0
        %1191 = vmatprep.subr.mxu0 0.0
        %1192 = vmatpush2.msra.mxu0 0.0
        %1193 = vmatprep.subr.mxu0 0.0
        %1194 = vmatpush2.msra.mxu0 0.0
        %1195 = vmatprep.subr.mxu0 0.0
        %1196 = vmatpush2.msra.mxu0 0.0
        %1197 = vmatprep.subr.mxu0 0.0
        %1198 = vmatpush2.msra.mxu0 0.0
        %1199 = vmatprep.subr.mxu0 0.0
        %1200 = vmatpush2.msra.mxu0 0.0
        %1201 = vmatprep.subr.mxu0 0.0
        %1202 = vmatpush2.msra.mxu0 0.0
        %1203 = vmatprep.subr.mxu0 0.0
        %1204 = vmatpush2.msra.mxu0 0.0
        %1205 = vmatprep.subr.mxu0 0.0
        %1206 = vmatpush2.msra.mxu0 0.0
        %1207 = vmatprep.subr.mxu0 0.0
        %1208 = vmatpush2.msra.mxu0 0.0
        %1209 = vmatprep.mubr.f32.mxu0 0.0
        %1210 = vmatmul.mubr.f32.gmra.mxu0 %v1098
        %v1211 = vpop.f32.mrf.mxu0
        %v1212 = vadd.f32 %v1094, %v1211
        %v1213 = vpop.f32.mrf.mxu0
        %1214 = vmatprep.mubr.f32.mxu0 0.0
        %1215 = vmatmul.mubr.f32.gmra.mxu0 %v1101
        %v1216 = vpop.f32.mrf.mxu0
        %v1217 = vadd.f32 %v1094, %v1216
        %v1218 = vpop.f32.mrf.mxu0
        %1219 = vmatprep.mubr.f32.mxu0 0.0
        %1220 = vmatmul.mubr.f32.gmra.mxu0 %v1104
        %v1221 = vpop.f32.mrf.mxu0
        %v1222 = vadd.f32 %v1094, %v1221
        %v1223 = vpop.f32.mrf.mxu0
        %1224 = vmatprep.mubr.f32.mxu0 0.0
        %1225 = vmatmul.mubr.f32.gmra.mxu0 %v1107
        %v1226 = vpop.f32.mrf.mxu0
        %v1227 = vadd.f32 %v1094, %v1226
        %v1228 = vpop.f32.mrf.mxu0
        %1229 = vmatprep.mubr.f32.mxu0 0.0
        %1230 = vmatmul.mubr.f32.gmra.mxu0 %v1110
        %v1231 = vpop.f32.mrf.mxu0
        %v1232 = vadd.f32 %v1094, %v1231
        %v1233 = vpop.f32.mrf.mxu0
        %1234 = vmatprep.mubr.f32.mxu0 0.0
        %1235 = vmatmul.mubr.f32.gmra.mxu0 %v1113
        %v1236 = vpop.f32.mrf.mxu0
        %v1237 = vadd.f32 %v1094, %v1236
        %v1238 = vpop.f32.mrf.mxu0
        %1239 = vmatprep.mubr.f32.mxu0 0.0
        %1240 = vmatmul.mubr.f32.gmra.mxu0 %v1116
        %v1241 = vpop.f32.mrf.mxu0
        %v1242 = vadd.f32 %v1094, %v1241
        %v1243 = vpop.f32.mrf.mxu0
        %1244 = vmatprep.mubr.f32.mxu0 0.0
        %1245 = vmatmul.mubr.f32.gmra.mxu0 %v1119
        %v1246 = vpop.f32.mrf.mxu0
        %v1247 = vadd.f32 %v1094, %v1246
        %v1248 = vpop.f32.mrf.mxu0
        %1249 = vmatprep.mubr.f32.mxu0 0.0
        %1250 = vmatmul.mubr.f32.gmra.mxu0 %v1122
        %v1251 = vpop.f32.mrf.mxu0
        %v1252 = vadd.f32 %v1094, %v1251
        %v1253 = vpop.f32.mrf.mxu0
        %1254 = vmatprep.mubr.f32.mxu0 0.0
        %1255 = vmatmul.mubr.f32.gmra.mxu0 %v1125
        %v1256 = vpop.f32.mrf.mxu0
        %v1257 = vadd.f32 %v1094, %v1256
        %v1258 = vpop.f32.mrf.mxu0
        %1259 = vmatprep.mubr.f32.mxu0 0.0
        %1260 = vmatmul.mubr.f32.gmra.mxu0 %v1128
        %v1261 = vpop.f32.mrf.mxu0
        %v1262 = vadd.f32 %v1094, %v1261
        %v1263 = vpop.f32.mrf.mxu0
        %1264 = vmatprep.mubr.f32.mxu0 0.0
        %1265 = vmatmul.mubr.f32.gmra.mxu0 %v1131
        %v1266 = vpop.f32.mrf.mxu0
        %v1267 = vadd.f32 %v1094, %v1266
        %v1268 = vpop.f32.mrf.mxu0
        %1269 = vmatprep.mubr.f32.mxu0 0.0
        %1270 = vmatmul.mubr.f32.gmra.mxu0 %v1134
        %v1271 = vpop.f32.mrf.mxu0
        %v1272 = vadd.f32 %v1094, %v1271
        %v1273 = vpop.f32.mrf.mxu0
        %1274 = vmatprep.mubr.f32.mxu0 0.0
        %1275 = vmatmul.mubr.f32.gmra.mxu0 %v1137
        %v1276 = vpop.f32.mrf.mxu0
        %v1277 = vadd.f32 %v1094, %v1276
        %v1278 = vpop.f32.mrf.mxu0
        %1279 = vmatprep.mubr.f32.mxu0 0.0
        %1280 = vmatmul.mubr.f32.gmra.mxu0 %v1140
        %v1281 = vpop.f32.mrf.mxu0
        %v1282 = vadd.f32 %v1094, %v1281
        %v1283 = vpop.f32.mrf.mxu0
        %1284 = vmatprep.mubr.f32.mxu0 0.0
        %1285 = vmatmul.mubr.f32.gmra.mxu0 %v1143
        %v1286 = vpop.f32.mrf.mxu0
        %v1287 = vadd.f32 %v1094, %v1286
        %v1288 = vpop.f32.mrf.mxu0
        %1289 = vdwg.mxu0
        %1290 = vst [vmem:[%s284] sm:$0xff] %v1212
        %1291 = vst [vmem:[%s284 + $0x8] sm:$0xff] %v1217
        %1292 = vst [vmem:[%s284 + $0x10] sm:$0xff] %v1222
        %1293 = vst [vmem:[%s284 + $0x18] sm:$0xff] %v1227
        %1294 = vst [vmem:[%s284 + $0x20] sm:$0xff] %v1232
        %1295 = vst [vmem:[%s284 + $0x28] sm:$0xff] %v1237
        %1296 = vst [vmem:[%s284 + $0x30] sm:$0xff] %v1242
        %1297 = vst [vmem:[%s284 + $0x38] sm:$0xff] %v1247
        %1298 = vst [vmem:[%s284 + $0x40] sm:$0xff] %v1252
        %1299 = vst [vmem:[%s284 + $0x48] sm:$0xff] %v1257
        %1300 = vst [vmem:[%s284 + $0x50] sm:$0xff] %v1262
        %1301 = vst [vmem:[%s284 + $0x58] sm:$0xff] %v1267
        %1302 = vst [vmem:[%s284 + $0x60] sm:$0xff] %v1272
        %1303 = vst [vmem:[%s284 + $0x68] sm:$0xff] %v1277
        %1304 = vst [vmem:[%s284 + $0x70] sm:$0xff] %v1282
        %1305 = vst [vmem:[%s284 + $0x78] sm:$0xff] %v1287
        %s1306 = sand.u32 %s181, 1
        %s1307 = scalar_lea.sflag [#allocation3], %s1306
        %s1308 = sand.u32 %s181, 1
        %s1309 = smul.addr %s1308, 128
        %s1310 = scalar_lea.vmem [#allocation2], %s1309
        // Predicated region
        $region49: #{tpu_custom_call.1} parent=47 // pred_check
          %p1311 = pneg %p191
        $region50: #{tpu_custom_call.1} parent=47 // pred_check_branch
          %1313 = sbr.rel (%p1311) target = $region52
        $region51: #{tpu_custom_call.1} parent=47 // pred_region
          %s1314 = smul.u32 16, %s21
          %s1315 = ssub.s32 63, %s1314
          %p1316 = scmp.lt.s32.totalorder %s1315, 16
          %s1317 = scalar_select %p1316, %s1315, 16
          %s1318 = smul.u32 128, %s1317
          %s1320 = ssub.s32 2048, %s1318
          %1321 = vsyncadd %s1307, %s1320
          %p1322 = scmp.ne.s32.totalorder 0, %s1318
          %s1323 = smul.addr %s1314, 128
          %s1324 = scalar_lea.hbm %s7, %s1323
          %s1325 = smul.u32 8, %s1317
          %s1326 = sshll.u32 %s1310, 4
          %s1327 = int_to_ptr.vmem [resolvable:$true] %s1326
          %s1328 = sshll.u32 %s1325, 4
          %1332 = dma.vmem_to_hbm [thread:$0]  (%p1322), %s1327, %s1328, %s1324, %s1307, 128, 128, 8
        $region52: #{tpu_custom_call.1} parent=47 // pred_fallthru
          _
      $region48: #{tpu_custom_call.1} parent=5 // pred_fallthru
        _
      %p1333 = scmp.le.s32.totalorder 2, %s16
      // Predicated region
      $region53: #{tpu_custom_call.1} parent=5 // pred_check
        %p1334 = pneg %p1333
      $region54: #{tpu_custom_call.1} parent=5 // pred_check_branch
        %1336 = sbr.rel (%p1334) target = $region56
      $region55: #{tpu_custom_call.1} parent=5 // pred_region
        %s1337 = ssub.s32 %s16, 2
        // Predicated region
        $region57: #{tpu_custom_call.1} parent=55 // pred_check
          %p1338 = pneg %p197
        $region58: #{tpu_custom_call.1} parent=55 // pred_check_branch
          %1340 = sbr.rel (%p1338) target = $region60
        $region59: #{tpu_custom_call.1} parent=55 // pred_region
          %s1341 = sand.u32 %s182, 1
          %s1342 = scalar_lea.sflag [#allocation3], %s1341
          %s1343 = sand.u32 %s182, 1
          %s1344 = smul.addr %s1343, 128
          %s1345 = scalar_lea.vmem [#allocation2], %s1344
          %1346 = dma.done %s1342, 2048
        $region60: #{tpu_custom_call.1} parent=55 // pred_fallthru
          _
      $region56: #{tpu_custom_call.1} parent=5 // pred_fallthru
        _
    $region6: #{tpu_custom_call.1} parent=1 // loop_footer
      %s20 = sadd.s32 1, %s16
    $region7: #{tpu_custom_call.1} parent=1 // loop_footer_branch
      %15 = sbr.rel target = $region3
    $region8: #{tpu_custom_call.1} parent=1 // loop_exit
      _
    %1347 = vsyncpa [#allocation3], 1
    %s1348 = scalar_lea.sflag [#allocation3], 1
    %1349 = vsyncpa %s1348, 1

</llo_original>
